<compile_context>
chip_gen: v7x
topology: tpu7x:2x2x1
jax: 0.10.0
libtpu: 0.0.40
codegen_flags: <defaults>
</compile_context>

<pallas_src>
import functools

import numpy as np
import jax
import jax.numpy as jnp
from jax.experimental import pallas as pl
from jax.experimental.pallas import tpu as pltpu


_MAX_ROW_TILE = 2048        # max rows per block, last-axis single-pass path
_TWO_PASS_TN = 2048         # N-chunk width, long-row (last-axis) two-pass path
_TWO_PASS_TS = 1024         # S-chunk height, huge-S (middle-axis) two-pass path
_TARGET_GRID_STEPS = 8      # keep pipeline + v7x megacore busy


def _round_down(x, m):
    return (x // m) * m


def _round_up(x, m):
    return ((x + m - 1) // m) * m


def _sublane_multiple(dtype):
    # f32 -> 8, bf16 -> 16, int8/fp8 -> 32 rows per packed sublane tile.
    return max(8, 32 // jnp.dtype(dtype).itemsize)


@functools.lru_cache(maxsize=1)
def _vmem_budget():
    """(working_set_budget_bytes, vmem_limit_bytes), tuned per TPU generation."""
    try:
        kind = jax.devices()[0].device_kind.lower()
    except Exception:  # pragma: no cover
        kind = ""
    if "v7" in kind:                                   # 64 MiB physical VMEM / TC
        return 28 * 1024 * 1024, 48 * 1024 * 1024
    if any(g in kind for g in ("v6", "v5", "v4")):     # 128 MiB physical VMEM
        return 48 * 1024 * 1024, 80 * 1024 * 1024
    return 32 * 1024 * 1024, 64 * 1024 * 1024          # unknown: conservative


def _compiler_params(dim_semantics):
    _, vmem_limit = _vmem_budget()
    return pltpu.CompilerParams(
        dimension_semantics=dim_semantics,
        vmem_limit_bytes=vmem_limit,
    )


def _pick_tile(total, fit, hard_cap, multiple, target_steps=_TARGET_GRID_STEPS):
    """Largest `multiple`-aligned tile <= fit/hard_cap that still leaves about
    `target_steps` grid steps when the problem is big enough (pipelining +
    megacore)."""
    if total <= multiple:
        return total
    fit = max(multiple, _round_down(min(fit, hard_cap), multiple))
    desired = max(multiple, _round_up(pl.cdiv(total, target_steps), multiple))
    return min(fit, desired)


def _pick_divisor_tile(n, max_tile, multiple=128):
    """Largest multiple of `multiple` <= max_tile that divides n exactly
    (0 if none): lets the two-pass kernels skip tail masking entirely."""
    best = 0
    for t in range(multiple, min(max_tile, n) + 1, multiple):
        if n % t == 0:
            best = t
    return best


# ---------------------------------------------------------------------------
# Kernels
# ---------------------------------------------------------------------------

def _softmax_lane_kernel(x_ref, o_ref):
    """Numerically-stable softmax along the last (lane) axis of a (TM, N) block."""
    x = x_ref[...].astype(jnp.float32)
    m = jnp.max(x, axis=-1, keepdims=True)
    e = jnp.exp(x - m)
    s = jnp.sum(e, axis=-1, keepdims=True)
    o_ref[...] = (e / s).astype(o_ref.dtype)


def _softmax_sublane_kernel(x_ref, o_ref):
    """Softmax along axis 1 (sublanes) of a (TB, S, TT) block."""
    x = x_ref[...].astype(jnp.float32)
    m = jnp.max(x, axis=1, keepdims=True)
    e = jnp.exp(x - m)
    s = jnp.sum(e, axis=1, keepdims=True)
    o_ref[...] = (e / s).astype(o_ref.dtype)


def _softmax_stats_kernel(x_ref, m_ref, l_ref, *, n_total, tn, needs_mask):
    """Online running-max / rescaled-sum over N chunks (grid axis 1, arbitrary)."""
    k = pl.program_id(1)
    x = x_ref[...].astype(jnp.float32)
    if needs_mask:
        # Only emitted when N % tn != 0: keeps per-element iota/compare/select
        # out of the hot loop for divisible shapes.
        col = jax.lax.broadcasted_iota(jnp.int32, x.shape, 1) + k * tn
        x = jnp.where(col < n_total, x, -jnp.inf)

    @pl.when(k == 0)
    def _():
        m_ref[...] = jnp.full(m_ref.shape, -jnp.inf, dtype=jnp.float32)
        l_ref[...] = jnp.zeros(l_ref.shape, dtype=jnp.float32)

    m_old = m_ref[...]
    m_new = jnp.maximum(m_old, jnp.max(x, axis=-1, keepdims=True))
    e = jnp.exp(x - m_new)
    l_ref[...] = l_ref[...] * jnp.exp(m_old - m_new) + jnp.sum(
        e, axis=-1, keepdims=True)
    m_ref[...] = m_new


def _softmax_normalize_kernel(x_ref, m_ref, l_ref, o_ref):
    x = x_ref[...].astype(jnp.float32)
    e = jnp.exp(x - m_ref[...])
    o_ref[...] = (e / l_ref[...]).astype(o_ref.dtype)


def _softmax_mid_stats_kernel(x_ref, m_ref, l_ref, *, s_total, ts, needs_mask):
    """Online stats over S (sublane) chunks for the huge-S middle-dim path."""
    k = pl.program_id(2)
    x = x_ref[...].astype(jnp.float32)
    if needs_mask:
        row = jax.lax.broadcasted_iota(jnp.int32, x.shape, 1) + k * ts
        x = jnp.where(row < s_total, x, -jnp.inf)

    @pl.when(k == 0)
    def _():
        m_ref[...] = jnp.full(m_ref.shape, -jnp.inf, dtype=jnp.float32)
        l_ref[...] = jnp.zeros(l_ref.shape, dtype=jnp.float32)

    m_old = m_ref[...]
    m_new = jnp.maximum(m_old, jnp.max(x, axis=1, keepdims=True))
    e = jnp.exp(x - m_new)
    l_ref[...] = l_ref[...] * jnp.exp(m_old - m_new) + jnp.sum(
        e, axis=1, keepdims=True)
    m_ref[...] = m_new


def _softmax_mid_normalize_kernel(x_ref, m_ref, l_ref, o_ref):
    x = x_ref[...].astype(jnp.float32)
    e = jnp.exp(x - m_ref[...])
    o_ref[...] = (e / l_ref[...]).astype(o_ref.dtype)


# ---------------------------------------------------------------------------
# pallas_call drivers
# ---------------------------------------------------------------------------

def _softmax_lastdim(x2, tm):
    M, N = x2.shape
    return pl.pallas_call(
        _softmax_lane_kernel,
        out_shape=jax.ShapeDtypeStruct((M, N), x2.dtype),
        grid_spec=pl.GridSpec(
            grid=(pl.cdiv(M, tm),),
            in_specs=[pl.BlockSpec((tm, N), lambda i: (i, 0))],
            out_specs=pl.BlockSpec((tm, N), lambda i: (i, 0)),
        ),
        compiler_params=_compiler_params(("parallel",)),
    )(x2)


def _softmax_lastdim_two_pass(x2, tm, tn):
    """Two-pass online softmax along the last axis, tiling both rows and N."""
    M, N = x2.shape
    grid = (pl.cdiv(M, tm), pl.cdiv(N, tn))
    needs_mask = (N % tn) != 0
    stats = functools.partial(_softmax_stats_kernel, n_total=N, tn=tn,
                              needs_mask=needs_mask)
    m, l = pl.pallas_call(
        stats,
        out_shape=(jax.ShapeDtypeStruct((M, 1), jnp.float32),
                   jax.ShapeDtypeStruct((M, 1), jnp.float32)),
        grid_spec=pl.GridSpec(
            grid=grid,
            in_specs=[pl.BlockSpec((tm, tn), lambda i, k: (i, k))],
            out_specs=(pl.BlockSpec((tm, 1), lambda i, k: (i, 0)),
                       pl.BlockSpec((tm, 1), lambda i, k: (i, 0))),
        ),
        compiler_params=_compiler_params(("parallel", "arbitrary")),
    )(x2)
    return pl.pallas_call(
        _softmax_normalize_kernel,
        out_shape=jax.ShapeDtypeStruct((M, N), x2.dtype),
        grid_spec=pl.GridSpec(
            grid=grid,
            in_specs=[pl.BlockSpec((tm, tn), lambda i, k: (i, k)),
                      pl.BlockSpec((tm, 1), lambda i, k: (i, 0)),
                      pl.BlockSpec((tm, 1), lambda i, k: (i, 0))],
            out_specs=pl.BlockSpec((tm, tn), lambda i, k: (i, k)),
        ),
        compiler_params=_compiler_params(("parallel", "parallel")),
    )(x2, m, l)


def _softmax_middle(x3, tb, tt):
    B, S, T = x3.shape
    return pl.pallas_call(
        _softmax_sublane_kernel,
        out_shape=jax.ShapeDtypeStruct((B, S, T), x3.dtype),
        grid_spec=pl.GridSpec(
            grid=(pl.cdiv(B, tb), pl.cdiv(T, tt)),
            in_specs=[pl.BlockSpec((tb, S, tt), lambda b, t: (b, 0, t))],
            out_specs=pl.BlockSpec((tb, S, tt), lambda b, t: (b, 0, t)),
        ),
        compiler_params=_compiler_params(("parallel", "parallel")),
    )(x3)


def _softmax_middle_two_pass(x3, tb, ts, tt):
    """Two-pass online softmax over the sublane (middle) axis, tiling S."""
    B, S, T = x3.shape
    grid = (pl.cdiv(B, tb), pl.cdiv(T, tt), pl.cdiv(S, ts))
    needs_mask = (S % ts) != 0
    stats = functools.partial(_softmax_mid_stats_kernel, s_total=S, ts=ts,
                              needs_mask=needs_mask)
    m, l = pl.pallas_call(
        stats,
        out_shape=(jax.ShapeDtypeStruct((B, 1, T), jnp.float32),
                   jax.ShapeDtypeStruct((B, 1, T), jnp.float32)),
        grid_spec=pl.GridSpec(
            grid=grid,
            in_specs=[pl.BlockSpec((tb, ts, tt), lambda b, t, s: (b, s, t))],
            out_specs=(pl.BlockSpec((tb, 1, tt), lambda b, t, s: (b, 0, t)),
                       pl.BlockSpec((tb, 1, tt), lambda b, t, s: (b, 0, t))),
        ),
        compiler_params=_compiler_params(("parallel", "parallel", "arbitrary")),
    )(x3)
    return pl.pallas_call(
        _softmax_mid_normalize_kernel,
        out_shape=jax.ShapeDtypeStruct((B, S, T), x3.dtype),
        grid_spec=pl.GridSpec(
            grid=grid,
            in_specs=[pl.BlockSpec((tb, ts, tt), lambda b, t, s: (b, s, t)),
                      pl.BlockSpec((tb, 1, tt), lambda b, t, s: (b, 0, t)),
                      pl.BlockSpec((tb, 1, tt), lambda b, t, s: (b, 0, t))],
            out_specs=pl.BlockSpec((tb, ts, tt), lambda b, t, s: (b, s, t)),
        ),
        compiler_params=_compiler_params(("parallel", "parallel", "parallel")),
    )(x3, m, l)


# ---------------------------------------------------------------------------
# Tile selection for the middle-dim (sublane-reduce) path
# ---------------------------------------------------------------------------

def _choose_middle_tiles(B, S, T, s_pad, budget, bytes_per_elem):
    per_lead_full = s_pad * _round_up(T, 128) * bytes_per_elem
    tb_fit = max(1, budget // per_lead_full) if per_lead_full <= budget else 1
    # Keep >= ~_TARGET_GRID_STEPS grid steps when the array is big enough;
    # split the rest of the step target over the (also parallel) T axis.
    tb = max(1, min(B, tb_fit, pl.cdiv(B, min(B, _TARGET_GRID_STEPS))))
    grid_b = pl.cdiv(B, tb)
    tt_fit = max(128, _round_down(budget // (tb * s_pad * bytes_per_elem), 128))
    remaining = pl.cdiv(_TARGET_GRID_STEPS, grid_b)
    tt_steps_cap = max(128, _round_up(pl.cdiv(T, remaining), 128))
    tt = min(_round_up(T, 128), tt_fit, tt_steps_cap)
    if tt >= T:
        tt = T
    return tb, tt


# ---------------------------------------------------------------------------
# Public wrapper: equivalent of torch.nn.Softmax(dim)(x)
# ---------------------------------------------------------------------------

@functools.partial(jax.jit, static_argnames=("dim",))
def pallas_softmax(x, dim=-1):
    ndim = x.ndim
    if ndim == 0:
        return jnp.ones_like(x)
    dim = dim % ndim
    shape = x.shape
    if x.size == 0:
        return x

    itemsize = jnp.dtype(x.dtype).itemsize
    sub = _sublane_multiple(x.dtype)
    budget, _ = _vmem_budget()
    # Double-buffered in + out blocks plus ~2 full-tile f32 temporaries
    # (the exp tile + one live intermediate; the f32 upcast is a no-op for f32).
    bytes_per_elem = 4 * itemsize + 2 * 4

    # Collapse trailing size-1 dims: softmax over `dim` then reduces over the
    # innermost non-trivial axis of a free (rows, N) reshape.
    last_eff = ndim - 1
    while last_eff > 0 and shape[last_eff] == 1:
        last_eff -= 1

    if dim >= last_eff:
        # Softmax along the (effective) innermost axis -> reduce over lanes.
        # TODO(synk): for N << 128 a lane-dense repack (softmax axis folded onto
        # sublanes) would avoid masked partial stores; needs a physical relayout.
        N = shape[dim]
        M = int(np.prod(shape)) // N
        x2 = x.reshape(M, N)
        n_lanes = _round_up(N, 128)                     # VMEM lane padding
        tm_fit = budget // (n_lanes * bytes_per_elem)
        if tm_fit >= sub:
            tm = _pick_tile(M, tm_fit, _MAX_ROW_TILE, sub)
            out2 = _softmax_lastdim(x2, tm)
        else:
            # Very long rows: tile N too (online stats + normalize passes).
            tn = _pick_divisor_tile(N, _TWO_PASS_TN)    # avoid tail masking
            if tn == 0:
                tn = min(_TWO_PASS_TN, _round_down(N, 128))
            tm_fit2 = budget // (tn * bytes_per_elem)
            tm = _pick_tile(M, tm_fit2, 1024, sub)
            out2 = _softmax_lastdim_two_pass(x2, tm, tn)
        return out2.reshape(shape)

    # dim is not the (effective) last axis: view as (lead, S, trail) -- a free
    # reshape of the contiguous layout -- and reduce over the sublane axis.
    S = shape[dim]
    B = int(np.prod(shape[:dim])) if dim > 0 else 1
    T = int(np.prod(shape[dim + 1:]))
    x3 = x.reshape(B, S, T)
    s_pad = _round_up(S, sub)                            # sublane padding of S
    per_col = s_pad * 128 * bytes_per_elem               # one lead row, one lane column
    if per_col <= budget:
        tb, tt = _choose_middle_tiles(B, S, T, s_pad, budget, bytes_per_elem)
        out3 = _softmax_middle(x3, tb, tt)
    else:
        # S so large that even a single 128-lane column exceeds the VMEM
        # budget: tiled-S online softmax (same 3-HBM-pass cost as wide rows).
        ts_fit = _round_down(budget // (128 * bytes_per_elem), sub)
        ts = max(sub, min(_TWO_PASS_TS, ts_fit))
        tt_fit = _round_down(budget // (ts * bytes_per_elem), 128)
        tt = max(128, min(tt_fit, _round_up(T, 128)))
        if tt >= T:
            tt = T
        out3 = _softmax_middle_two_pass(x3, 1, ts, tt)
    return out3.reshape(shape)


# ---------------------------------------------------------------------------

if __name__ == "__main__":
    key = jax.random.PRNGKey(0)
    k1, k2, k3 = jax.random.split(key, 3)

    rtol, atol = 1e-4, 1e-6

    # NCHW-style tensor consistent with the module's generic forward.
    x = jax.random.normal(k1, (2, 4, 16, 16), dtype=jnp.float32)
    for dim in (-1, 1, 0):
        y = jax.block_until_ready(pallas_softmax(x, dim=dim))
        np.testing.assert_allclose(np.asarray(y),
                                   np.asarray(jax.nn.softmax(x, axis=dim)),
                                   rtol=rtol, atol=atol)
        np.testing.assert_allclose(np.asarray(jnp.sum(y, axis=dim)), 1.0,
                                   rtol=1e-5, atol=1e-5)

    # Ragged shapes (partial blocks, dims not multiples of 8/128).
    x_odd = jax.random.normal(k2, (3, 5, 7), dtype=jnp.float32)
    for dim in (-1, 1):
        y = jax.block_until_ready(pallas_softmax(x_odd, dim=dim))
        np.testing.assert_allclose(np.asarray(y),
                                   np.asarray(jax.nn.softmax(x_odd, axis=dim)),
                                   rtol=rtol, atol=atol)

    # Exercise the two-pass (tiled-N, online-stats) long-row path directly,
    # with non-divisible tiles so the tail-masking / partial-block code runs.
    x_wide = jax.random.normal(k3, (50, 1000), dtype=jnp.float32)
    y = jax.block_until_ready(_softmax_lastdim_two_pass(x_wide, tm=32, tn=256))
    np.testing.assert_allclose(np.asarray(y),
                               np.asarray(jax.nn.softmax(x_wide, axis=-1)),
                               rtol=rtol, atol=atol)

    # Exercise the tiled-S (huge-S middle-dim) online path directly with small
    # tiles so the sublane masking and accumulator blocks are covered.
    x_mid = jax.random.normal(k3, (2, 40, 160), dtype=jnp.float32)
    y = jax.block_until_ready(_softmax_middle_two_pass(x_mid, tb=1, ts=16, tt=128))
    np.testing.assert_allclose(np.asarray(y),
                               np.asarray(jax.nn.softmax(x_mid, axis=1)),
                               rtol=rtol, atol=atol)

    print("KERNEL_OK")
</pallas_src>

<mosaic_0001>
module attributes {stable_mosaic.version = 11 : i64} {
  func.func @_softmax_lane_kernel(%arg0: i32, %arg1: memref<16x16xf32, #tpu.memory_space<vmem>>, %arg2: memref<16x16xf32, #tpu.memory_space<vmem>>) attributes {dimension_semantics = [#tpu.dimension_semantics<parallel>], iteration_bounds = array<i64: 8>, scalar_prefetch = 0 : i64, scratch_operands = 0 : i64, tpu.core_type = #tpu.core_type<tc>, window_params = [{transform_indices = @transform_0, window_bounds = array<i64: 16, 16>}, {transform_indices = @transform_1, window_bounds = array<i64: 16, 16>}]} {
    %c0 = arith.constant 0 : index
    %c0_0 = arith.constant 0 : index
    %0 = vector.load %arg1[%c0, %c0_0] : memref<16x16xf32, #tpu.memory_space<vmem>>, vector<16x16xf32>
    %cst = arith.constant dense<0xFF800000> : vector<16xf32>
    %1 = vector.multi_reduction <maximumf>, %0, %cst [1] : vector<16x16xf32> to vector<16xf32>
    %2 = vector.shape_cast %1 : vector<16xf32> to vector<16x1xf32>
    %3 = vector.broadcast %2 : vector<16x1xf32> to vector<16x16xf32>
    %4 = arith.subf %0, %3 : vector<16x16xf32>
    %5 = math.exp %4 : vector<16x16xf32>
    %cst_1 = arith.constant dense<0.000000e+00> : vector<16xf32>
    %6 = vector.multi_reduction <add>, %5, %cst_1 [1] : vector<16x16xf32> to vector<16xf32>
    %7 = vector.shape_cast %6 : vector<16xf32> to vector<16x1xf32>
    %8 = vector.broadcast %7 : vector<16x1xf32> to vector<16x16xf32>
    %9 = arith.divf %5, %8 : vector<16x16xf32>
    %c0_2 = arith.constant 0 : index
    %c0_3 = arith.constant 0 : index
    %10 = vector.load %arg2[%c0_2, %c0_3] : memref<16x16xf32, #tpu.memory_space<vmem>>, vector<16x16xf32>
    tpu.vector_store %arg2[%c0_2, %c0_3], %9 {strides = array<i32>} : memref<16x16xf32, #tpu.memory_space<vmem>>, vector<16x16xf32>,
    return
  }
  func.func @transform_0(%arg0: i32) -> (i32, i32) {
    %c0_i32 = arith.constant 0 : i32
    %c0_i32_0 = arith.constant 0 : i32
    return %arg0, %c0_i32 : i32, i32
  }
  func.func @transform_1(%arg0: i32) -> (i32, i32) {
    %c0_i32 = arith.constant 0 : i32
    %c0_i32_0 = arith.constant 0 : i32
    return %arg0, %c0_i32 : i32, i32
  }
}

</mosaic_0001>

<llo_original>
// kernel: pallas_softmax.1
$region0: #{pallas_softmax.1}
  #allocation0 [shape = 'u32[]', space=smem, size = 0x4, offset = 0x4, fixed_abs, tag = 'smem constant byte address 0x4 - core index']
  #allocation1 [shape = 'u32[144,128]{1,0:T(1,128)}', space=vmem, size = 0x12000, scoped, tag = 'internal scratch']
  %s0 = inlined_call_operand.hbm [shape: f32[128,16], index: 0, kind: input, shape index: {}]
  %s1 = inlined_call_operand.hbm [shape: f32[128,16], index: 1, kind: output, shape index: {}]
  %s2 = sld [smem:[#allocation0]]
  $region41: #{pallas_softmax.1} parent=0
    _
  %s4 = ssub.s32 1, %s2
  %s5 = scalar_select 0, %s4, %s2
  $region1: #{pallas_softmax.1} parent=0
    #allocation2 [shape = 'u8[16384]{0}', space=vmem, size = 0x4000, scoped, tag = 'input window, operand 0']
    #allocation3 [shape = 's32[2]{0}', space=sflag, size = 0x8, scoped, tag = 'scoped memory for pallas_softmax.1']
    #allocation4 [shape = 's32[2]{0}', space=sflag, size = 0x8, scoped, tag = 'scoped memory for pallas_softmax.1']
    #allocation5 [shape = 'u8[16384]{0}', space=vmem, size = 0x4000, scoped, tag = 'output window, operand 0']
    %6 = vsyncpa [#allocation3], 0
    %s7 = scalar_lea.sflag [#allocation3], 1
    %8 = vsyncpa %s7, 0
    %9 = vsyncpa [#allocation4], 0
    %s10 = scalar_lea.sflag [#allocation4], 1
    %11 = vsyncpa %s10, 0
    loop: start=0, step=1, limit=10
    $region2: #{pallas_softmax.1} parent=1 // loop_pre_header
      _
    $region3: #{pallas_softmax.1} parent=1 // loop_header
      %s13 = sphi 0, %s17
      %p14 = scmp.ge.s32.totalorder %s13, 10
      %s23 = sphi 0, %s25
      %s26 = sphi 0, %s23
      %s27 = sphi 0, %s26
      %s43 = sphi 0, %s27
      %s49 = sphi 0, %s51
      %s52 = sphi 0, %s49
      %s53 = sphi 0, %s52
      %s69 = sphi 0, %s53
    $region4: #{pallas_softmax.1} parent=1 // loop_header_branch
      %16 = sbr.rel (%p14) target = $region8
    $region5: #{pallas_softmax.1} parent=1 // loop_body
      %s18 = ssub.s32 %s13, 1
      %s19 = ssub.s32 %s13, 2
      %s20 = sadd.s32 %s13, 1
      %s21 = ssub.s32 %s13, %s20
      %p22 = scmp.eq.s32.totalorder %s21, 0
      %s24 = sadd.s32 %s23, 1
      %s25 = scalar_select %p22, %s23, %s24
      %p28 = pneg %p22
      %p29 = scmp.eq.s32.totalorder %s13, 7
      %p30 = por %p28, %p29
      %p31 = scmp.ne.s32.totalorder %s23, %s26
      %p32 = scmp.eq.s32.totalorder %s13, 0
      %p33 = por %p31, %p32
      %p34 = scmp.ne.s32.totalorder %s23, %s26
      %p35 = scmp.eq.s32.totalorder %s18, 7
      %p36 = por %p34, %p35
      %p37 = scmp.ne.s32.totalorder %s26, %s27
      %p38 = scmp.eq.s32.totalorder %s18, 0
      %p39 = por %p37, %p38
      %p40 = scmp.ne.s32.totalorder %s26, %s27
      %p41 = scmp.eq.s32.totalorder %s19, 7
      %p42 = por %p40, %p41
      %p44 = scmp.ne.s32.totalorder %s27, %s43
      %p45 = scmp.eq.s32.totalorder %s19, 0
      %p46 = por %p44, %p45
      %s47 = ssub.s32 %s13, %s20
      %p48 = scmp.eq.s32.totalorder %s47, 0
      %s50 = sadd.s32 %s49, 1
      %s51 = scalar_select %p48, %s49, %s50
      %p54 = pneg %p48
      %p55 = scmp.eq.s32.totalorder %s13, 7
      %p56 = por %p54, %p55
      %p57 = scmp.ne.s32.totalorder %s49, %s52
      %p58 = scmp.eq.s32.totalorder %s13, 0
      %p59 = por %p57, %p58
      %p60 = scmp.ne.s32.totalorder %s49, %s52
      %p61 = scmp.eq.s32.totalorder %s18, 7
      %p62 = por %p60, %p61
      %p63 = scmp.ne.s32.totalorder %s52, %s53
      %p64 = scmp.eq.s32.totalorder %s18, 0
      %p65 = por %p63, %p64
      %p66 = scmp.ne.s32.totalorder %s52, %s53
      %p67 = scmp.eq.s32.totalorder %s19, 7
      %p68 = por %p66, %p67
      %p70 = scmp.ne.s32.totalorder %s53, %s69
      %p71 = scmp.eq.s32.totalorder %s19, 0
      %p72 = por %p70, %p71
      %p73 = scmp.le.s32.totalorder 1, %s13
      %p74 = scmp.lt.s32.totalorder %s13, 9
      %p75 = pnand %p73, %p74
      %p76 = pneg %p75
      // Predicated region
      $region9: #{pallas_softmax.1} parent=5 // pred_check
        _
      $region10: #{pallas_softmax.1} parent=5 // pred_check_branch
        %78 = sbr.rel (%p75) target = $region12
      $region11: #{pallas_softmax.1} parent=5 // pred_region
        %s79 = ssub.s32 %s13, 1
      $region12: #{pallas_softmax.1} parent=5 // pred_fallthru
        _
      %p80 = scmp.lt.s32.totalorder %s13, 8
      // Predicated region
      $region13: #{pallas_softmax.1} parent=5 // pred_check
        %p81 = pneg %p80
      $region14: #{pallas_softmax.1} parent=5 // pred_check_branch
        %83 = sbr.rel (%p81) target = $region16
      $region15: #{pallas_softmax.1} parent=5 // pred_region
        // Predicated region
        $region17: #{pallas_softmax.1} parent=15 // pred_check
          %p84 = pneg %p33
        $region18: #{pallas_softmax.1} parent=15 // pred_check_branch
          %86 = sbr.rel (%p84) target = $region20
        $region19: #{pallas_softmax.1} parent=15 // pred_region
          %s87 = sand.u32 %s23, 1
          %s88 = scalar_lea.sflag [#allocation3], %s87
          %s89 = sand.u32 %s23, 1
          %s90 = smul.addr %s89, 16
          %s91 = scalar_lea.vmem [#allocation2], %s90
          %s92 = smul.u32 2, %s13
          %s94 = ssub.s32 256, 256
          %95 = vsyncadd %s88, %s94
          %s96 = smul.addr %s92, 128
          %s97 = scalar_lea.hbm %s0, %s96
          %s98 = sshll.u32 %s91, 4
          %s99 = int_to_ptr.vmem [resolvable:$true] %s98
          %104 = dma.hbm_to_vmem [thread:$0]  %s97, 256, %s99, %s88, 128, 128, 8
        $region20: #{pallas_softmax.1} parent=15 // pred_fallthru
          _
      $region16: #{pallas_softmax.1} parent=5 // pred_fallthru
        _
      %p105 = scmp.le.s32.totalorder 1, %s13
      %p106 = scmp.lt.s32.totalorder %s13, 9
      %p107 = pnand %p105, %p106
      %p108 = pneg %p107
      // Predicated region
      $region21: #{pallas_softmax.1} parent=5 // pred_check
        _
      $region22: #{pallas_softmax.1} parent=5 // pred_check_branch
        %110 = sbr.rel (%p107) target = $region24
      $region23: #{pallas_softmax.1} parent=5 // pred_region
        %s111 = ssub.s32 %s13, 1
        %s112 = sand.u32 %s26, 1
        %s113 = scalar_lea.sflag [#allocation3], %s112
        %s114 = sand.u32 %s26, 1
        %s115 = smul.addr %s114, 16
        %s116 = scalar_lea.vmem [#allocation2], %s115
        // Predicated region
        $region25: #{pallas_softmax.1} parent=23 // pred_check
          %p117 = pneg %p39
        $region26: #{pallas_softmax.1} parent=23 // pred_check_branch
          %119 = sbr.rel (%p117) target = $region28
        $region27: #{pallas_softmax.1} parent=23 // pred_region
          %120 = dma.done %s113, 256
        $region28: #{pallas_softmax.1} parent=23 // pred_fallthru
          _
        %s121 = sand.u32 %s26, 1
        %s122 = scalar_lea.sflag [#allocation3], %s121
        %s123 = sand.u32 %s26, 1
        %s124 = smul.addr %s123, 16
        %s125 = scalar_lea.vmem [#allocation2], %s124
        %p126 = pneg %p39
        %p127 = pneg %p36
        %p128 = pneg %p65
        %p129 = pneg %p62
        %s130 = sand.u32 %s52, 1
        %s131 = scalar_lea.sflag [#allocation4], %s130
        %s132 = sand.u32 %s52, 1
        %s133 = smul.addr %s132, 16
        %s134 = scalar_lea.vmem [#allocation5], %s133
        %s135 = smul.u32 2, %s18
        %s136 = smul.u32 2, %s18
        %v137 = vld [vmem:[%s116] sm:$0xff]
        %v138 = vld [vmem:[%s116 + $0x8] sm:$0xff]
        %vm139 = vcmask 130048
        %v140 = vsel %vm139, %v137, -inf
        %141 = vmax.xlane.f32.xlu0 %v140
        %v142 = vpop.xlane.xlu0 %141
        %v143 = vsel %vm139, %v138, -inf
        %144 = vmax.xlane.f32.xlu0 %v143
        %v145 = vpop.xlane.xlu0 %144
        %v146 = vsub.f32 %v137, %v142
        %v147 = vsub.f32 %v138, %v145
        %v148 = vmul.f32 %v146, 1.442695
        %v149 = vpow.pop %v148
        %v150 = vmul.f32 %v147, 1.442695
        %v151 = vpow.pop %v150
        %v152 = vsel %vm139, %v149, 0.0
        %153 = vadd.xlane.f32.xlu0 %v152
        %v154 = vpop.xlane.xlu0 %153
        %v155 = vsel %vm139, %v151, 0.0
        %156 = vadd.xlane.f32.xlu0 %v155
        %v157 = vpop.xlane.xlu0 %156
        %v158 = vrcp.pop %v154
        %v159 = vmul.f32 %v149, %v158
        %v160 = vrcp.pop %v157
        %v161 = vmul.f32 %v151, %v160
        %162 = vst.msk [vmem:[%s134] sm:$0xff] %vm139, %v159
        %163 = vst.msk [vmem:[%s134 + $0x8] sm:$0xff] %vm139, %v161
        %s164 = sand.u32 %s52, 1
        %s165 = scalar_lea.sflag [#allocation4], %s164
        %s166 = sand.u32 %s52, 1
        %s167 = smul.addr %s166, 16
        %s168 = scalar_lea.vmem [#allocation5], %s167
        // Predicated region
        $region29: #{pallas_softmax.1} parent=23 // pred_check
          %p169 = pneg %p62
        $region30: #{pallas_softmax.1} parent=23 // pred_check_branch
          %171 = sbr.rel (%p169) target = $region32
        $region31: #{pallas_softmax.1} parent=23 // pred_region
          %s172 = smul.u32 2, %s18
          %s174 = ssub.s32 256, 256
          %175 = vsyncadd %s165, %s174
          %s176 = smul.addr %s172, 128
          %s177 = scalar_lea.hbm %s1, %s176
          %s178 = sshll.u32 %s168, 4
          %s179 = int_to_ptr.vmem [resolvable:$true] %s178
          %184 = dma.vmem_to_hbm [thread:$0]  %s179, 256, %s177, %s165, 128, 128, 8
        $region32: #{pallas_softmax.1} parent=23 // pred_fallthru
          _
      $region24: #{pallas_softmax.1} parent=5 // pred_fallthru
        _
      %p185 = scmp.le.s32.totalorder 2, %s13
      // Predicated region
      $region33: #{pallas_softmax.1} parent=5 // pred_check
        %p186 = pneg %p185
      $region34: #{pallas_softmax.1} parent=5 // pred_check_branch
        %188 = sbr.rel (%p186) target = $region36
      $region35: #{pallas_softmax.1} parent=5 // pred_region
        %s189 = ssub.s32 %s13, 2
        // Predicated region
        $region37: #{pallas_softmax.1} parent=35 // pred_check
          %p190 = pneg %p68
        $region38: #{pallas_softmax.1} parent=35 // pred_check_branch
          %192 = sbr.rel (%p190) target = $region40
        $region39: #{pallas_softmax.1} parent=35 // pred_region
          %s193 = sand.u32 %s53, 1
          %s194 = scalar_lea.sflag [#allocation4], %s193
          %s195 = sand.u32 %s53, 1
          %s196 = smul.addr %s195, 16
          %s197 = scalar_lea.vmem [#allocation5], %s196
          %198 = dma.done %s194, 256
        $region40: #{pallas_softmax.1} parent=35 // pred_fallthru
          _
      $region36: #{pallas_softmax.1} parent=5 // pred_fallthru
        _
    $region6: #{pallas_softmax.1} parent=1 // loop_footer
      %s17 = sadd.s32 1, %s13
    $region7: #{pallas_softmax.1} parent=1 // loop_footer_branch
      %12 = sbr.rel target = $region3
    $region8: #{pallas_softmax.1} parent=1 // loop_exit
      _
    %199 = vsyncpa [#allocation3], 1
    %s200 = scalar_lea.sflag [#allocation3], 1
    %201 = vsyncpa %s200, 1
    %202 = vsyncpa [#allocation4], 1
    %s203 = scalar_lea.sflag [#allocation4], 1
    %204 = vsyncpa %s203, 1

</llo_original>
